<compile_context>
chip_gen: v7x
topology: tpu7x:2x2x1
jax: 0.10.0
libtpu: 0.0.40
codegen_flags: <defaults>
</compile_context>

<pallas_src>
import jax
import jax.numpy as jnp
from jax.experimental import pallas as pl
from jax.experimental.pallas import tpu as pltpu


def _nodireft_kernel(x_ref, w_ls_t_ref, b_ls_ref, w_proj_ref, o_ref):
    # x_ref:       (tm, Dp)
    # w_ls_t_ref:  (Dp, R)   learned_source.weight, pre-transposed in the wrapper
    # b_ls_ref:    (1, R)    learned_source.bias, pre-cast to f32
    # w_proj_ref:  (R, Dp)   proj_layer.weight
    # o_ref:       (tm, Dp)
    x = x_ref[...]
    # learned_source(x): (tm, Dp) @ (Dp, R) -> (tm, R), f32 accumulation on the MXU.
    h = jnp.dot(x, w_ls_t_ref[...], preferred_element_type=jnp.float32)
    h = h + b_ls_ref[...]                          # bias already f32, broadcast over rows
    # @ proj_layer.weight: (tm, R) @ (R, Dp) -> (tm, Dp), f32 accumulation.
    out = jnp.dot(h.astype(w_proj_ref.dtype), w_proj_ref[...],
                  preferred_element_type=jnp.float32)
    o_ref[...] = out.astype(o_ref.dtype)


def _sublane_multiple(dtype) -> int:
    # f32 -> 8, bf16 -> 16, int8/fp8 -> 32 (packed sublane granularity).
    nbytes = jnp.dtype(dtype).itemsize
    return max(8, 32 // nbytes)


def _vmem_tile_bytes(rows, cols, dtype) -> int:
    """Bytes of a 2D tile once padded to TPU (sublane, lane) layout."""
    sub = _sublane_multiple(dtype)
    r = ((rows + sub - 1) // sub) * sub
    c = ((cols + 127) // 128) * 128
    return r * c * jnp.dtype(dtype).itemsize


def _vmem_capacity_bytes() -> int:
    """Best-effort physical VMEM query; conservative fallbacks if unavailable."""
    try:
        return int(pltpu.get_tpu_info().vmem_capacity_bytes)
    except Exception:
        pass
    try:
        kind = jax.devices()[0].device_kind.lower()
        if "v7" in kind or "7x" in kind:
            return 64 << 20
    except Exception:
        pass
    return 128 << 20


def nodireft_intervention(x, w_ls, b_ls, w_proj, *, tm=None, vmem_limit_bytes=None):
    """x: (..., D); w_ls: (R, D); b_ls: (R,); w_proj: (R, D). Returns (..., D)."""
    orig_shape = x.shape
    D = orig_shape[-1]
    R = w_ls.shape[0]
    x2 = x.reshape(-1, D)
    M = x2.shape[0]

    itemsize = jnp.dtype(x.dtype).itemsize
    sub = _sublane_multiple(x.dtype)

    # --- pad D to a lane multiple so stores are unmasked (no-op for usual embed dims) ---
    Dp = ((D + 127) // 128) * 128
    if Dp != D:
        x2 = jnp.pad(x2, ((0, 0), (0, Dp - D)))
        w_ls = jnp.pad(w_ls, ((0, 0), (0, Dp - D)))
        w_proj = jnp.pad(w_proj, ((0, 0), (0, Dp - D)))

    # Hoist the W_ls transpose out of the grid loop: done once in XLA, kernel sees (Dp, R).
    w_ls_t = jnp.transpose(w_ls)                        # (Dp, R)
    b_ls_2d = b_ls.reshape(1, R).astype(jnp.float32)    # pre-cast: no per-step VPU cast

    # --- generation-aware budgets ---
    phys_vmem = _vmem_capacity_bytes()
    small_vmem = phys_vmem <= (96 << 20)    # v7x-class: 64 MiB VMEM, ~3.2 TB/s HBM
    if small_vmem:
        target_tile_bytes = 6 << 20         # ~24 MiB of pipelined x/out tiles
        max_tile_bytes = 6 << 20
        vmem_cap = 40 << 20                 # leave >= 24 MiB headroom of 64 MiB
    else:
        target_tile_bytes = 4 << 20
        max_tile_bytes = 12 << 20           # lets tm stay >= 256 rows for very large D
        vmem_cap = 96 << 20                 # 128 MiB physical on v5e / v6e

    row_bytes = Dp * itemsize

    # --- row-tile selection from byte target ---
    if tm is None:
        tm = max(sub, target_tile_bytes // row_bytes)
        if not small_vmem and tm < 256:
            tm = max(tm, min(256, max_tile_bytes // row_bytes))
    tm = int(min(tm, M))
    if tm < M:
        tm = max(sub, (tm // sub) * sub)    # (8,128) rule (dtype-dependent sublane multiple)
    # Keep >= 2 grid steps so the parallel row grid can shard across v7x's 2 TensorCores.
    if M >= 2 * sub:
        half = ((pl.cdiv(M, 2) + sub - 1) // sub) * sub
        tm = min(tm, half)
    tm = int(tm)

    # --- VMEM estimate (weights double-buffered even with constant index_map) ---
    w_dt = w_ls_t.dtype
    weights_bytes = 2 * (_vmem_tile_bytes(Dp, R, w_dt)
                         + _vmem_tile_bytes(R, Dp, w_dt)
                         + _vmem_tile_bytes(1, R, jnp.float32))

    def _needed_vmem(rows):
        tiles = 2 * 2 * rows * Dp * itemsize            # x + out, double-buffered
        return int(1.25 * (weights_bytes + tiles))

    # Shrink tm if the estimate would blow the generation-specific cap.
    while tm > 4 * sub and _needed_vmem(tm) > vmem_cap:
        tm = max(4 * sub, ((tm // 2) // sub) * sub)
    tm = int(tm)

    grid = (pl.cdiv(M, tm),)

    if vmem_limit_bytes is None:
        vmem_limit_bytes = int(min(max(_needed_vmem(tm), 16 << 20), vmem_cap))

    # Advisory cost: purely bandwidth-heavy (read x, write out, read weights once).
    cost = pl.CostEstimate(
        flops=int(4 * M * R * Dp),
        transcendentals=0,
        bytes_accessed=int(2 * M * Dp * itemsize
                           + (w_ls_t.size + w_proj.size) * jnp.dtype(w_dt).itemsize
                           + b_ls_2d.size * 4),
    )

    out = pl.pallas_call(
        _nodireft_kernel,
        out_shape=jax.ShapeDtypeStruct((M, Dp), x.dtype),
        grid=grid,
        in_specs=[
            pl.BlockSpec((tm, Dp), lambda i: (i, 0)),   # x tile      (pipelined)
            pl.BlockSpec((Dp, R), lambda i: (0, 0)),    # W_ls^T      (resident)
            pl.BlockSpec((1, R), lambda i: (0, 0)),     # bias (f32)  (resident)
            pl.BlockSpec((R, Dp), lambda i: (0, 0)),    # W_proj      (resident)
        ],
        out_specs=pl.BlockSpec((tm, Dp), lambda i: (i, 0)),
        compiler_params=pltpu.CompilerParams(
            dimension_semantics=("parallel",),          # shard row grid across TCs on v7x
            vmem_limit_bytes=vmem_limit_bytes,
        ),
        cost_estimate=cost,
    )(x2, w_ls_t, b_ls_2d, w_proj)

    if Dp != D:
        out = out[:, :D]
    return out.reshape(orig_shape)


if __name__ == "__main__":
    # Small shapes consistent with the module; D multiple of 128 -> lane-dense stores.
    batch, seq = 2, 8
    embed_dim = 128
    low_rank_dimension = 8
    interchange_dim = embed_dim  # unused in forward

    key = jax.random.PRNGKey(0)
    k_x, k_wls, k_bls, k_wproj = jax.random.split(key, 4)

    x = jax.random.normal(k_x, (batch, seq, embed_dim), dtype=jnp.float32)
    # Deterministic synthetic parameters (no checkpoint load).
    w_ls = jax.random.normal(k_wls, (low_rank_dimension, embed_dim),
                             dtype=jnp.float32) * 0.05   # learned_source.weight
    b_ls = jax.random.normal(k_bls, (low_rank_dimension,),
                             dtype=jnp.float32) * 0.05   # learned_source.bias
    w_proj = jax.random.normal(k_wproj, (low_rank_dimension, embed_dim),
                               dtype=jnp.float32) * 0.05  # proj_layer.weight

    out = nodireft_intervention(x, w_ls, b_ls, w_proj)
    out = jax.block_until_ready(out)

    # Reference check in plain JAX (mirrors the PyTorch forward).
    ref = (x @ w_ls.T + b_ls) @ w_proj
    assert out.shape == (batch, seq, embed_dim), out.shape
    assert jnp.allclose(out, ref, atol=1e-5, rtol=1e-5), "mismatch vs reference"

    print("KERNEL_OK")
</pallas_src>

<mosaic_0001>
module attributes {stable_mosaic.version = 11 : i64} {
  func.func @_nodireft_kernel(%arg0: i32, %arg1: memref<8x128xf32, #tpu.memory_space<vmem>>, %arg2: memref<128x8xf32, #tpu.memory_space<vmem>>, %arg3: memref<1x8xf32, #tpu.memory_space<vmem>>, %arg4: memref<8x128xf32, #tpu.memory_space<vmem>>, %arg5: memref<8x128xf32, #tpu.memory_space<vmem>>) attributes {dimension_semantics = [#tpu.dimension_semantics<parallel>], iteration_bounds = array<i64: 2>, scalar_prefetch = 0 : i64, scratch_operands = 0 : i64, tpu.core_type = #tpu.core_type<tc>, window_params = [{transform_indices = @transform_0, window_bounds = array<i64: 8, 128>}, {pipeline_mode = #tpu.pipeline_mode<synchronous>, transform_indices = @transform_1, window_bounds = array<i64: 128, 8>}, {pipeline_mode = #tpu.pipeline_mode<synchronous>, transform_indices = @transform_2, window_bounds = array<i64: 1, 8>}, {pipeline_mode = #tpu.pipeline_mode<synchronous>, transform_indices = @transform_3, window_bounds = array<i64: 8, 128>}, {transform_indices = @transform_4, window_bounds = array<i64: 8, 128>}]} {
    %c0 = arith.constant 0 : index
    %c0_0 = arith.constant 0 : index
    %0 = vector.load %arg1[%c0, %c0_0] : memref<8x128xf32, #tpu.memory_space<vmem>>, vector<8x128xf32>
    %c0_1 = arith.constant 0 : index
    %c0_2 = arith.constant 0 : index
    %1 = vector.load %arg2[%c0_1, %c0_2] : memref<128x8xf32, #tpu.memory_space<vmem>>, vector<128x8xf32>
    %cst = arith.constant dense<0.000000e+00> : vector<8x8xf32>
    %2 = tpu.matmul %0, %1, %cst {dimension_numbers = #tpu.dot_dimension_numbers<[1], [0], [0], [1], [0, 0, 1, 1], [], []>} : vector<8x128xf32>, vector<128x8xf32>, vector<8x8xf32> -> vector<8x8xf32>
    %c0_3 = arith.constant 0 : index
    %c0_4 = arith.constant 0 : index
    %3 = vector.load %arg3[%c0_3, %c0_4] : memref<1x8xf32, #tpu.memory_space<vmem>>, vector<1x8xf32>
    %4 = vector.broadcast %3 : vector<1x8xf32> to vector<8x8xf32>
    %5 = arith.addf %2, %4 : vector<8x8xf32>
    %c0_5 = arith.constant 0 : index
    %c0_6 = arith.constant 0 : index
    %6 = vector.load %arg4[%c0_5, %c0_6] : memref<8x128xf32, #tpu.memory_space<vmem>>, vector<8x128xf32>
    %cst_7 = arith.constant dense<0.000000e+00> : vector<8x128xf32>
    %7 = tpu.matmul %5, %6, %cst_7 {dimension_numbers = #tpu.dot_dimension_numbers<[1], [0], [0], [1], [0, 0, 1, 1], [], []>} : vector<8x8xf32>, vector<8x128xf32>, vector<8x128xf32> -> vector<8x128xf32>
    %c0_8 = arith.constant 0 : index
    %c0_9 = arith.constant 0 : index
    %8 = vector.load %arg5[%c0_8, %c0_9] : memref<8x128xf32, #tpu.memory_space<vmem>>, vector<8x128xf32>
    tpu.vector_store %arg5[%c0_8, %c0_9], %7 {strides = array<i32>} : memref<8x128xf32, #tpu.memory_space<vmem>>, vector<8x128xf32>,
    return
  }
  func.func @transform_0(%arg0: i32) -> (i32, i32) {
    %c0_i32 = arith.constant 0 : i32
    %c0_i32_0 = arith.constant 0 : i32
    return %arg0, %c0_i32 : i32, i32
  }
  func.func @transform_1(%arg0: i32) -> (i32, i32) {
    %c0_i32 = arith.constant 0 : i32
    %c0_i32_0 = arith.constant 0 : i32
    %c0_i32_1 = arith.constant 0 : i32
    return %c0_i32, %c0_i32_0 : i32, i32
  }
  func.func @transform_2(%arg0: i32) -> (i32, i32) {
    %c0_i32 = arith.constant 0 : i32
    %c0_i32_0 = arith.constant 0 : i32
    %c0_i32_1 = arith.constant 0 : i32
    return %c0_i32, %c0_i32_0 : i32, i32
  }
  func.func @transform_3(%arg0: i32) -> (i32, i32) {
    %c0_i32 = arith.constant 0 : i32
    %c0_i32_0 = arith.constant 0 : i32
    %c0_i32_1 = arith.constant 0 : i32
    return %c0_i32, %c0_i32_0 : i32, i32
  }
  func.func @transform_4(%arg0: i32) -> (i32, i32) {
    %c0_i32 = arith.constant 0 : i32
    %c0_i32_0 = arith.constant 0 : i32
    return %arg0, %c0_i32 : i32, i32
  }
}

</mosaic_0001>

<llo_original>
// kernel: tpu_custom_call.1
$region0: #{tpu_custom_call.1}
  #allocation0 [shape = 'u32[]', space=smem, size = 0x4, offset = 0x4, fixed_abs, tag = 'smem constant byte address 0x4 - core index']
  #allocation1 [shape = 'u32[144,128]{1,0:T(1,128)}', space=vmem, size = 0x12000, scoped, tag = 'internal scratch']
  %s0 = inlined_call_operand.vmem [shape: f32[16,128], index: 0, kind: input, shape index: {}]
  %s1 = inlined_call_operand.vmem [shape: f32[128,8], index: 1, kind: input, shape index: {}]
  %s2 = inlined_call_operand.vmem [shape: f32[1,8], index: 2, kind: input, shape index: {}]
  %s3 = inlined_call_operand.vmem [shape: f32[8,128], index: 3, kind: input, shape index: {}]
  %s4 = inlined_call_operand.hbm [shape: f32[16,128], index: 4, kind: output, shape index: {}]
  %s5 = sld [smem:[#allocation0]]
  $region49: #{tpu_custom_call.1} parent=0
    _
  %s7 = ssub.s32 1, %s5
  %s8 = scalar_select 0, %s7, %s5
  $region1: #{tpu_custom_call.1} parent=0
    #allocation2 [shape = 'u8[8192]{0}', space=vmem, size = 0x2000, scoped, tag = 'output window, operand 0']
    #allocation3 [shape = 's32[2]{0}', space=sflag, size = 0x8, scoped, tag = 'scoped memory for tpu_custom_call.1']
    %9 = vsyncpa [#allocation3], 0
    %s10 = scalar_lea.sflag [#allocation3], 1
    %11 = vsyncpa %s10, 0
    loop: start=0, step=1, limit=4
    $region2: #{tpu_custom_call.1} parent=1 // loop_pre_header
      _
    $region3: #{tpu_custom_call.1} parent=1 // loop_header
      %s13 = sphi 0, %s17
      %p14 = scmp.ge.s32.totalorder %s13, 4
      %s23 = sphi 0, %s25
      %s26 = sphi 0, %s23
      %s27 = sphi 0, %s26
      %s43 = sphi 0, %s27
      %s47 = sphi 0, %s47
      %s49 = sphi 0, %s47
      %s50 = sphi 0, %s49
      %s64 = sphi 0, %s50
      %s68 = sphi 0, %s68
      %s70 = sphi 0, %s68
      %s71 = sphi 0, %s70
      %s85 = sphi 0, %s71
      %s89 = sphi 0, %s89
      %s91 = sphi 0, %s89
      %s92 = sphi 0, %s91
      %s106 = sphi 0, %s92
      %s112 = sphi 0, %s114
      %s115 = sphi 0, %s112
      %s116 = sphi 0, %s115
      %s132 = sphi 0, %s116
    $region4: #{tpu_custom_call.1} parent=1 // loop_header_branch
      %16 = sbr.rel (%p14) target = $region8
    $region5: #{tpu_custom_call.1} parent=1 // loop_body
      %s18 = ssub.s32 %s13, 1
      %s19 = ssub.s32 %s13, 2
      %s20 = sadd.s32 %s13, 1
      %s21 = ssub.s32 %s13, %s20
      %p22 = scmp.eq.s32.totalorder %s21, 0
      %s24 = sadd.s32 %s23, 1
      %s25 = scalar_select %p22, %s23, %s24
      %p28 = pneg %p22
      %p29 = scmp.eq.s32.totalorder %s13, 1
      %p30 = por %p28, %p29
      %p31 = scmp.ne.s32.totalorder %s23, %s26
      %p32 = scmp.eq.s32.totalorder %s13, 0
      %p33 = por %p31, %p32
      %p34 = scmp.ne.s32.totalorder %s23, %s26
      %p35 = scmp.eq.s32.totalorder %s18, 1
      %p36 = por %p34, %p35
      %p37 = scmp.ne.s32.totalorder %s26, %s27
      %p38 = scmp.eq.s32.totalorder %s18, 0
      %p39 = por %p37, %p38
      %p40 = scmp.ne.s32.totalorder %s26, %s27
      %p41 = scmp.eq.s32.totalorder %s19, 1
      %p42 = por %p40, %p41
      %p44 = scmp.ne.s32.totalorder %s27, %s43
      %p45 = scmp.eq.s32.totalorder %s19, 0
      %p46 = por %p44, %p45
      %s48 = sadd.s32 %s47, 1
      %p51 = scmp.eq.s32.totalorder %s13, 1
      %p52 = scmp.ne.s32.totalorder %s47, %s49
      %p53 = scmp.eq.s32.totalorder %s13, 0
      %p54 = por %p52, %p53
      %p55 = scmp.ne.s32.totalorder %s47, %s49
      %p56 = scmp.eq.s32.totalorder %s18, 1
      %p57 = por %p55, %p56
      %p58 = scmp.ne.s32.totalorder %s49, %s50
      %p59 = scmp.eq.s32.totalorder %s18, 0
      %p60 = por %p58, %p59
      %p61 = scmp.ne.s32.totalorder %s49, %s50
      %p62 = scmp.eq.s32.totalorder %s19, 1
      %p63 = por %p61, %p62
      %p65 = scmp.ne.s32.totalorder %s50, %s64
      %p66 = scmp.eq.s32.totalorder %s19, 0
      %p67 = por %p65, %p66
      %s69 = sadd.s32 %s68, 1
      %p72 = scmp.eq.s32.totalorder %s13, 1
      %p73 = scmp.ne.s32.totalorder %s68, %s70
      %p74 = scmp.eq.s32.totalorder %s13, 0
      %p75 = por %p73, %p74
      %p76 = scmp.ne.s32.totalorder %s68, %s70
      %p77 = scmp.eq.s32.totalorder %s18, 1
      %p78 = por %p76, %p77
      %p79 = scmp.ne.s32.totalorder %s70, %s71
      %p80 = scmp.eq.s32.totalorder %s18, 0
      %p81 = por %p79, %p80
      %p82 = scmp.ne.s32.totalorder %s70, %s71
      %p83 = scmp.eq.s32.totalorder %s19, 1
      %p84 = por %p82, %p83
      %p86 = scmp.ne.s32.totalorder %s71, %s85
      %p87 = scmp.eq.s32.totalorder %s19, 0
      %p88 = por %p86, %p87
      %s90 = sadd.s32 %s89, 1
      %p93 = scmp.eq.s32.totalorder %s13, 1
      %p94 = scmp.ne.s32.totalorder %s89, %s91
      %p95 = scmp.eq.s32.totalorder %s13, 0
      %p96 = por %p94, %p95
      %p97 = scmp.ne.s32.totalorder %s89, %s91
      %p98 = scmp.eq.s32.totalorder %s18, 1
      %p99 = por %p97, %p98
      %p100 = scmp.ne.s32.totalorder %s91, %s92
      %p101 = scmp.eq.s32.totalorder %s18, 0
      %p102 = por %p100, %p101
      %p103 = scmp.ne.s32.totalorder %s91, %s92
      %p104 = scmp.eq.s32.totalorder %s19, 1
      %p105 = por %p103, %p104
      %p107 = scmp.ne.s32.totalorder %s92, %s106
      %p108 = scmp.eq.s32.totalorder %s19, 0
      %p109 = por %p107, %p108
      %s110 = ssub.s32 %s13, %s20
      %p111 = scmp.eq.s32.totalorder %s110, 0
      %s113 = sadd.s32 %s112, 1
      %s114 = scalar_select %p111, %s112, %s113
      %p117 = pneg %p111
      %p118 = scmp.eq.s32.totalorder %s13, 1
      %p119 = por %p117, %p118
      %p120 = scmp.ne.s32.totalorder %s112, %s115
      %p121 = scmp.eq.s32.totalorder %s13, 0
      %p122 = por %p120, %p121
      %p123 = scmp.ne.s32.totalorder %s112, %s115
      %p124 = scmp.eq.s32.totalorder %s18, 1
      %p125 = por %p123, %p124
      %p126 = scmp.ne.s32.totalorder %s115, %s116
      %p127 = scmp.eq.s32.totalorder %s18, 0
      %p128 = por %p126, %p127
      %p129 = scmp.ne.s32.totalorder %s115, %s116
      %p130 = scmp.eq.s32.totalorder %s19, 1
      %p131 = por %p129, %p130
      %p133 = scmp.ne.s32.totalorder %s116, %s132
      %p134 = scmp.eq.s32.totalorder %s19, 0
      %p135 = por %p133, %p134
      %p136 = scmp.le.s32.totalorder 1, %s13
      %p137 = scmp.lt.s32.totalorder %s13, 3
      %p138 = pnand %p136, %p137
      %p139 = pneg %p138
      // Predicated region
      $region9: #{tpu_custom_call.1} parent=5 // pred_check
        _
      $region10: #{tpu_custom_call.1} parent=5 // pred_check_branch
        %141 = sbr.rel (%p138) target = $region12
      $region11: #{tpu_custom_call.1} parent=5 // pred_region
        %s142 = ssub.s32 %s13, 1
        // Predicated region
        $region13: #{tpu_custom_call.1} parent=11 // pred_check
          %p143 = pneg %p60
        $region14: #{tpu_custom_call.1} parent=11 // pred_check_branch
          %145 = sbr.rel (%p143) target = $region16
        $region15: #{tpu_custom_call.1} parent=11 // pred_region
          _
        $region16: #{tpu_custom_call.1} parent=11 // pred_fallthru
          _
        // Predicated region
        $region17: #{tpu_custom_call.1} parent=11 // pred_check
          %p146 = pneg %p81
        $region18: #{tpu_custom_call.1} parent=11 // pred_check_branch
          %148 = sbr.rel (%p146) target = $region20
        $region19: #{tpu_custom_call.1} parent=11 // pred_region
          _
        $region20: #{tpu_custom_call.1} parent=11 // pred_fallthru
          _
        // Predicated region
        $region21: #{tpu_custom_call.1} parent=11 // pred_check
          %p149 = pneg %p102
        $region22: #{tpu_custom_call.1} parent=11 // pred_check_branch
          %151 = sbr.rel (%p149) target = $region24
        $region23: #{tpu_custom_call.1} parent=11 // pred_region
          _
        $region24: #{tpu_custom_call.1} parent=11 // pred_fallthru
          _
      $region12: #{tpu_custom_call.1} parent=5 // pred_fallthru
        _
      %p152 = scmp.lt.s32.totalorder %s13, 2
      // Predicated region
      $region25: #{tpu_custom_call.1} parent=5 // pred_check
        %p153 = pneg %p152
      $region26: #{tpu_custom_call.1} parent=5 // pred_check_branch
        %155 = sbr.rel (%p153) target = $region28
      $region27: #{tpu_custom_call.1} parent=5 // pred_region
        // Predicated region
        $region29: #{tpu_custom_call.1} parent=27 // pred_check
          %p156 = pneg %p33
        $region30: #{tpu_custom_call.1} parent=27 // pred_check_branch
          %158 = sbr.rel (%p156) target = $region32
        $region31: #{tpu_custom_call.1} parent=27 // pred_region
          %p159 = scmp.lt.s32.totalorder %s13, 1
          %s160 = scalar_select %p159, %s13, 1
          %s161 = smul.addr %s160, 8
          %s162 = scalar_lea.vmem %s0, %s161
        $region32: #{tpu_custom_call.1} parent=27 // pred_fallthru
          _
      $region28: #{tpu_custom_call.1} parent=5 // pred_fallthru
        _
      %p163 = scmp.le.s32.totalorder 1, %s13
      %p164 = scmp.lt.s32.totalorder %s13, 3
      %p165 = pnand %p163, %p164
      %p166 = pneg %p165
      // Predicated region
      $region33: #{tpu_custom_call.1} parent=5 // pred_check
        _
      $region34: #{tpu_custom_call.1} parent=5 // pred_check_branch
        %168 = sbr.rel (%p165) target = $region36
      $region35: #{tpu_custom_call.1} parent=5 // pred_region
        %s169 = ssub.s32 %s13, 1
        %p170 = scmp.lt.s32.totalorder %s18, 1
        %s171 = scalar_select %p170, %s18, 1
        %s172 = smul.addr %s171, 8
        %s173 = scalar_lea.vmem %s0, %s172
        %p174 = pneg %p39
        %p175 = pneg %p36
        %p176 = pneg %p60
        %p177 = pneg %p57
        %p178 = pneg %p81
        %p179 = pneg %p78
        %p180 = pneg %p102
        %p181 = pneg %p99
        %p182 = pneg %p128
        %p183 = pneg %p125
        %s184 = sand.u32 %s115, 1
        %s185 = scalar_lea.sflag [#allocation3], %s184
        %s186 = sand.u32 %s115, 1
        %s187 = smul.addr %s186, 8
        %s188 = scalar_lea.vmem [#allocation2], %s187
        %p189 = scmp.lt.s32.totalorder %s18, 1
        %s190 = scalar_select %p189, %s18, 1
        %s191 = smul.addr %s190, 8
        %s192 = scalar_lea.vmem %s0, %s191
        %v193 = vld [vmem:[%s192] sm:$0xff]
        %v194 = vld [vmem:[%s1] sm:$0xff]
        %v195 = vld [vmem:[%s1 + $0x8] sm:$0xff]
        %v196 = vld [vmem:[%s1 + $0x10] sm:$0xff]
        %v197 = vld [vmem:[%s1 + $0x18] sm:$0xff]
        %v198 = vld [vmem:[%s1 + $0x20] sm:$0xff]
        %v199 = vld [vmem:[%s1 + $0x28] sm:$0xff]
        %v200 = vld [vmem:[%s1 + $0x30] sm:$0xff]
        %v201 = vld [vmem:[%s1 + $0x38] sm:$0xff]
        %v202 = vld [vmem:[%s1 + $0x40] sm:$0xff]
        %v203 = vld [vmem:[%s1 + $0x48] sm:$0xff]
        %v204 = vld [vmem:[%s1 + $0x50] sm:$0xff]
        %v205 = vld [vmem:[%s1 + $0x58] sm:$0xff]
        %v206 = vld [vmem:[%s1 + $0x60] sm:$0xff]
        %v207 = vld [vmem:[%s1 + $0x68] sm:$0xff]
        %v208 = vld [vmem:[%s1 + $0x70] sm:$0xff]
        %v209 = vld [vmem:[%s1 + $0x78] sm:$0xff]
        %v210 = vld [vmem:[%s2] sm:$0x1]
        %v212 = vlaneseq
        %v213 = vshrl.u32 %v212, 7
        %v214 = vsub.s32 0, %v213
        %v215 = vrot.slane %v210, %v214
        %217 = vmatprep.subr.mxu0 0.0
        %218 = vmatpush1.msra.mxu0 %v194
        %219 = vmatprep.subr.mxu0 0.0
        %220 = vmatpush1.msra.mxu0 %v195
        %221 = vmatprep.subr.mxu0 0.0
        %222 = vmatpush1.msra.mxu0 %v196
        %223 = vmatprep.subr.mxu0 0.0
        %224 = vmatpush1.msra.mxu0 %v197
        %225 = vmatprep.subr.mxu0 0.0
        %226 = vmatpush1.msra.mxu0 %v198
        %227 = vmatprep.subr.mxu0 0.0
        %228 = vmatpush1.msra.mxu0 %v199
        %229 = vmatprep.subr.mxu0 0.0
        %230 = vmatpush1.msra.mxu0 %v200
        %231 = vmatprep.subr.mxu0 0.0
        %232 = vmatpush1.msra.mxu0 %v201
        %233 = vmatprep.subr.mxu0 0.0
        %234 = vmatpush1.msra.mxu0 %v202
        %235 = vmatprep.subr.mxu0 0.0
        %236 = vmatpush1.msra.mxu0 %v203
        %237 = vmatprep.subr.mxu0 0.0
        %238 = vmatpush1.msra.mxu0 %v204
        %239 = vmatprep.subr.mxu0 0.0
        %240 = vmatpush1.msra.mxu0 %v205
        %241 = vmatprep.subr.mxu0 0.0
        %242 = vmatpush1.msra.mxu0 %v206
        %243 = vmatprep.subr.mxu0 0.0
        %244 = vmatpush1.msra.mxu0 %v207
        %245 = vmatprep.subr.mxu0 0.0
        %246 = vmatpush1.msra.mxu0 %v208
        %247 = vmatprep.subr.mxu0 0.0
        %248 = vmatpush1.msra.mxu0 %v209
        %249 = vmatprep.subr.mxu0 0.0
        %250 = vmatpush1.msra.mxu0 0.0
        %251 = vmatprep.subr.mxu0 0.0
        %252 = vmatpush1.msra.mxu0 0.0
        %253 = vmatprep.subr.mxu0 0.0
        %254 = vmatpush1.msra.mxu0 0.0
        %255 = vmatprep.subr.mxu0 0.0
        %256 = vmatpush1.msra.mxu0 0.0
        %257 = vmatprep.subr.mxu0 0.0
        %258 = vmatpush1.msra.mxu0 0.0
        %259 = vmatprep.subr.mxu0 0.0
        %260 = vmatpush1.msra.mxu0 0.0
        %261 = vmatprep.subr.mxu0 0.0
        %262 = vmatpush1.msra.mxu0 0.0
        %263 = vmatprep.subr.mxu0 0.0
        %264 = vmatpush1.msra.mxu0 0.0
        %265 = vmatprep.subr.mxu0 0.0
        %266 = vmatpush1.msra.mxu0 0.0
        %267 = vmatprep.subr.mxu0 0.0
        %268 = vmatpush1.msra.mxu0 0.0
        %269 = vmatprep.subr.mxu0 0.0
        %270 = vmatpush1.msra.mxu0 0.0
        %271 = vmatprep.subr.mxu0 0.0
        %272 = vmatpush1.msra.mxu0 0.0
        %273 = vmatprep.subr.mxu0 0.0
        %274 = vmatpush1.msra.mxu0 0.0
        %275 = vmatprep.subr.mxu0 0.0
        %276 = vmatpush1.msra.mxu0 0.0
        %277 = vmatprep.subr.mxu0 0.0
        %278 = vmatpush1.msra.mxu0 0.0
        %279 = vmatprep.subr.mxu0 0.0
        %280 = vmatpush1.msra.mxu0 0.0
        %281 = vmatprep.mubr.f32.mxu0 0.0
        %282 = vmatmul.mubr.f32.gmra.mrb[0].mxu0 %v193
        %v283 = vpop.f32.mrb[0].mxu0
        %v284 = vadd.f32 %v215, %v283
        %v285 = vpop.f32.mrb[0].mxu0
        %286 = vdwg.mxu0
        %v287 = vld [vmem:[%s3] sm:$0xff]
        %vm288 = vcmask 64512
        %v290 = vsel %vm288, %v284, 0
        %292 = vmatprep.subr.mxu0 0.0
        %293 = vmatpush1.msra.mxu0 %v287
        %294 = vmatprep.subr.mxu0 0.0
        %295 = vmatpush1.msra.mxu0 0.0
        %296 = vmatprep.subr.mxu0 0.0
        %297 = vmatpush1.msra.mxu0 0.0
        %298 = vmatprep.subr.mxu0 0.0
        %299 = vmatpush1.msra.mxu0 0.0
        %300 = vmatprep.subr.mxu0 0.0
        %301 = vmatpush1.msra.mxu0 0.0
        %302 = vmatprep.subr.mxu0 0.0
        %303 = vmatpush1.msra.mxu0 0.0
        %304 = vmatprep.subr.mxu0 0.0
        %305 = vmatpush1.msra.mxu0 0.0
        %306 = vmatprep.subr.mxu0 0.0
        %307 = vmatpush1.msra.mxu0 0.0
        %308 = vmatprep.subr.mxu0 0.0
        %309 = vmatpush1.msra.mxu0 0.0
        %310 = vmatprep.subr.mxu0 0.0
        %311 = vmatpush1.msra.mxu0 0.0
        %312 = vmatprep.subr.mxu0 0.0
        %313 = vmatpush1.msra.mxu0 0.0
        %314 = vmatprep.subr.mxu0 0.0
        %315 = vmatpush1.msra.mxu0 0.0
        %316 = vmatprep.subr.mxu0 0.0
        %317 = vmatpush1.msra.mxu0 0.0
        %318 = vmatprep.subr.mxu0 0.0
        %319 = vmatpush1.msra.mxu0 0.0
        %320 = vmatprep.subr.mxu0 0.0
        %321 = vmatpush1.msra.mxu0 0.0
        %322 = vmatprep.subr.mxu0 0.0
        %323 = vmatpush1.msra.mxu0 0.0
        %324 = vmatprep.subr.mxu0 0.0
        %325 = vmatpush1.msra.mxu0 0.0
        %326 = vmatprep.subr.mxu0 0.0
        %327 = vmatpush1.msra.mxu0 0.0
        %328 = vmatprep.subr.mxu0 0.0
        %329 = vmatpush1.msra.mxu0 0.0
        %330 = vmatprep.subr.mxu0 0.0
        %331 = vmatpush1.msra.mxu0 0.0
        %332 = vmatprep.subr.mxu0 0.0
        %333 = vmatpush1.msra.mxu0 0.0
        %334 = vmatprep.subr.mxu0 0.0
        %335 = vmatpush1.msra.mxu0 0.0
        %336 = vmatprep.subr.mxu0 0.0
        %337 = vmatpush1.msra.mxu0 0.0
        %338 = vmatprep.subr.mxu0 0.0
        %339 = vmatpush1.msra.mxu0 0.0
        %340 = vmatprep.subr.mxu0 0.0
        %341 = vmatpush1.msra.mxu0 0.0
        %342 = vmatprep.subr.mxu0 0.0
        %343 = vmatpush1.msra.mxu0 0.0
        %344 = vmatprep.subr.mxu0 0.0
        %345 = vmatpush1.msra.mxu0 0.0
        %346 = vmatprep.subr.mxu0 0.0
        %347 = vmatpush1.msra.mxu0 0.0
        %348 = vmatprep.subr.mxu0 0.0
        %349 = vmatpush1.msra.mxu0 0.0
        %350 = vmatprep.subr.mxu0 0.0
        %351 = vmatpush1.msra.mxu0 0.0
        %352 = vmatprep.subr.mxu0 0.0
        %353 = vmatpush1.msra.mxu0 0.0
        %354 = vmatprep.subr.mxu0 0.0
        %355 = vmatpush1.msra.mxu0 0.0
        %356 = vmatprep.mubr.f32.mxu0 0.0
        %357 = vmatmul.mubr.f32.gmra.mrb[0].mxu0 %v290
        %v358 = vpop.f32.mrb[0].mxu0
        %v359 = vadd.f32 0.0, %v358
        %v360 = vpop.f32.mrb[0].mxu0
        %361 = vdwg.mxu0
        %362 = vst [vmem:[%s188] sm:$0xff] %v359
        %s363 = sand.u32 %s115, 1
        %s364 = scalar_lea.sflag [#allocation3], %s363
        %s365 = sand.u32 %s115, 1
        %s366 = smul.addr %s365, 8
        %s367 = scalar_lea.vmem [#allocation2], %s366
        // Predicated region
        $region37: #{tpu_custom_call.1} parent=35 // pred_check
          %p368 = pneg %p125
        $region38: #{tpu_custom_call.1} parent=35 // pred_check_branch
          %370 = sbr.rel (%p368) target = $region40
        $region39: #{tpu_custom_call.1} parent=35 // pred_region
          %s372 = ssub.s32 128, 128
          %373 = vsyncadd %s364, %s372
          %s374 = smul.addr %s18, 128
          %s375 = scalar_lea.hbm %s4, %s374
          %s377 = sshll.u32 %s367, 4
          %s378 = int_to_ptr.vmem [resolvable:$true] %s377
          %380 = dma.vmem_to_hbm [thread:$0]  %s378, 128, %s375, %s364
        $region40: #{tpu_custom_call.1} parent=35 // pred_fallthru
          _
      $region36: #{tpu_custom_call.1} parent=5 // pred_fallthru
        _
      %p381 = scmp.le.s32.totalorder 2, %s13
      // Predicated region
      $region41: #{tpu_custom_call.1} parent=5 // pred_check
        %p382 = pneg %p381
      $region42: #{tpu_custom_call.1} parent=5 // pred_check_branch
        %384 = sbr.rel (%p382) target = $region44
      $region43: #{tpu_custom_call.1} parent=5 // pred_region
        %s385 = ssub.s32 %s13, 2
        // Predicated region
        $region45: #{tpu_custom_call.1} parent=43 // pred_check
          %p386 = pneg %p131
        $region46: #{tpu_custom_call.1} parent=43 // pred_check_branch
          %388 = sbr.rel (%p386) target = $region48
        $region47: #{tpu_custom_call.1} parent=43 // pred_region
          %s389 = sand.u32 %s116, 1
          %s390 = scalar_lea.sflag [#allocation3], %s389
          %s391 = sand.u32 %s116, 1
          %s392 = smul.addr %s391, 8
          %s393 = scalar_lea.vmem [#allocation2], %s392
          %394 = dma.done %s390, 128
        $region48: #{tpu_custom_call.1} parent=43 // pred_fallthru
          _
      $region44: #{tpu_custom_call.1} parent=5 // pred_fallthru
        _
    $region6: #{tpu_custom_call.1} parent=1 // loop_footer
      %s17 = sadd.s32 1, %s13
    $region7: #{tpu_custom_call.1} parent=1 // loop_footer_branch
      %12 = sbr.rel target = $region3
    $region8: #{tpu_custom_call.1} parent=1 // loop_exit
      _
    %395 = vsyncpa [#allocation3], 1
    %s396 = scalar_lea.sflag [#allocation3], 1
    %397 = vsyncpa %s396, 1

</llo_original>
